<compile_context>
chip_gen: v7x
topology: tpu7x:2x2x1
jax: 0.10.0
libtpu: 0.0.40
codegen_flags: <defaults>
</compile_context>

<pallas_src>
import math
import functools

import jax
import jax.numpy as jnp
from jax import lax
from jax.experimental import pallas as pl
from jax.experimental.pallas import tpu as pltpu


# ----------------------------------------------------------------------------
# Generation-aware VMEM budget
# ----------------------------------------------------------------------------
@functools.lru_cache(maxsize=None)
def _vmem_limit_bytes():
    cap = 64 * 1024 * 1024
    try:
        cap = int(pltpu.get_tpu_info().vmem_capacity_bytes)
    except Exception:
        pass  # fall back to a conservative 64 MiB assumption
    # Leave headroom for compiler-internal scratch and double-buffered windows.
    return min(int(cap * 4 // 5), cap - (8 << 20))


def _compiler_params(dim_sems):
    return pltpu.CompilerParams(
        dimension_semantics=dim_sems,
        vmem_limit_bytes=_vmem_limit_bytes())


def _pick_tile(dim, target, align):
    """Largest tile <= target that is a multiple of `align` and divides `dim`.
    Falls back to the full dim (always legal: block == full array dim)."""
    # TODO(synk): pad awkward (prime-ish) dims to the next tile multiple instead
    # of falling back to one full-dim block.
    if dim <= target:
        return dim
    t = (target // align) * align
    while t >= align:
        if dim % t == 0:
            return t
        t -= align
    return dim


def _tile_targets(K, stacked=1):
    """Tile targets keeping the weight slab / activation block well inside VMEM."""
    w_budget = 8 << 20   # bytes per (stacked, K, tn) bf16 weight buffer
    a_budget = 2 << 20   # bytes per (tm, K) bf16 activation buffer
    tn_t = max(128, min(512, (w_budget // (stacked * K * 2) // 128) * 128))
    tm_t = max(16, min(512, (a_budget // (K * 2) // 16) * 16))
    return tm_t, tn_t


# ----------------------------------------------------------------------------
# Kernel 1a: generic tiled linear  y = x @ W + b
# Full-K per step; grid (B, N-tiles, S-tiles) with S innermost so the (K, tn)
# weight slab stays resident across the S sweep (read once per (b, j)).
# ----------------------------------------------------------------------------
def _linear_kernel(x_ref, w_ref, b_ref, o_ref):
    o_ref[...] = (jnp.dot(x_ref[...], w_ref[...],
                          preferred_element_type=jnp.float32)
                  + b_ref[...]).astype(o_ref.dtype)


def linear_projection(x, w_bf16, b_f32, out_dtype=jnp.bfloat16):
    B, S, K = x.shape
    K2, N = w_bf16.shape
    assert K == K2
    # TODO(synk): very large K (weight slab beyond the VMEM budget) would need a
    # K-reduction grid axis + f32 accumulator; typical transformer widths fit full-K.
    tm_t, tn_t = _tile_targets(K)
    tm = _pick_tile(S, tm_t, 16)
    tn = _pick_tile(N, tn_t, 128)
    grid = (B, N // tn, S // tm)

    return pl.pallas_call(
        _linear_kernel,
        out_shape=jax.ShapeDtypeStruct((B, S, N), out_dtype),
        grid=grid,
        in_specs=[
            pl.BlockSpec((None, tm, K), lambda b, j, si: (b, si, 0)),
            pl.BlockSpec((K, tn), lambda b, j, si: (0, j)),
            pl.BlockSpec((1, tn), lambda b, j, si: (0, j)),
        ],
        out_specs=pl.BlockSpec((None, tm, tn), lambda b, j, si: (b, si, j)),
        compiler_params=_compiler_params(("parallel", "parallel", "parallel")),
    )(x, w_bf16, b_f32)


# ----------------------------------------------------------------------------
# Kernel 1b: fused Q/K/V projection for distinct q/k/v activations.
#   q|k|v = x_{q|k|v} @ W_{q|k|v} + b_{q|k|v}  ->  packed (3, B, S, D) bf16
# ----------------------------------------------------------------------------
def _qkv_proj_kernel(xq_ref, xk_ref, xv_ref, w_ref, b_ref, o_ref):
    f32 = jnp.float32
    o_ref[0] = (jnp.dot(xq_ref[...], w_ref[0], preferred_element_type=f32)
                + b_ref[0]).astype(o_ref.dtype)
    o_ref[1] = (jnp.dot(xk_ref[...], w_ref[1], preferred_element_type=f32)
                + b_ref[1]).astype(o_ref.dtype)
    o_ref[2] = (jnp.dot(xv_ref[...], w_ref[2], preferred_element_type=f32)
                + b_ref[2]).astype(o_ref.dtype)


def fused_qkv_projection(xq, xk, xv, w_qkv_bf16, b_qkv_f32):
    B, S, D = xq.shape
    tm_t, tn_t = _tile_targets(D, stacked=3)
    tm = _pick_tile(S, tm_t, 16)
    tn = _pick_tile(D, tn_t, 128)
    grid = (B, D // tn, S // tm)  # S innermost: (3, D, tn) weight slab stays resident

    x_spec = pl.BlockSpec((None, tm, D), lambda b, j, si: (b, si, 0))
    return pl.pallas_call(
        _qkv_proj_kernel,
        out_shape=jax.ShapeDtypeStruct((3, B, S, D), jnp.bfloat16),
        grid=grid,
        in_specs=[
            x_spec, x_spec, x_spec,
            pl.BlockSpec((3, D, tn), lambda b, j, si: (0, 0, j)),
            pl.BlockSpec((3, 1, tn), lambda b, j, si: (0, 0, j)),
        ],
        out_specs=pl.BlockSpec((3, None, tm, tn), lambda b, j, si: (0, b, si, j)),
        compiler_params=_compiler_params(("parallel", "parallel", "parallel")),
    )(xq, xk, xv, w_qkv_bf16, b_qkv_f32)


# ----------------------------------------------------------------------------
# Kernel 2: flash-style multi-head attention (online softmax over KV tiles).
# Heads are grid-tiled in 128-lane groups; scale*log2(e) is pre-folded into W_q
# so the softmax uses exp2 and there is zero per-step rescaling.
# ----------------------------------------------------------------------------
def _flash_mha_kernel(q_ref, k_ref, v_ref, o_ref, m_scr, l_scr, acc_scr,
                      *, heads_per_group, d_k):
    ki = pl.program_id(3)

    @pl.when(ki == 0)
    def _():
        m_scr[...] = jnp.full_like(m_scr, -jnp.inf)
        l_scr[...] = jnp.zeros_like(l_scr)
        acc_scr[...] = jnp.zeros_like(acc_scr)

    for h in range(heads_per_group):
        lo = h * d_k
        q_h = q_ref[:, lo:lo + d_k]          # (tq, d_k)  bf16, scale/log2e folded
        k_h = k_ref[:, lo:lo + d_k]          # (tkv, d_k) bf16
        v_h = v_ref[:, lo:lo + d_k]          # (tkv, d_k) bf16

        # Contract the d_k dims directly (no explicit transpose).
        s = lax.dot_general(q_h, k_h, (((1,), (1,)), ((), ())),
                            preferred_element_type=jnp.float32)  # (tq, tkv), log2 domain

        m_prev = m_scr[h]                                        # (tq, 1)
        m_new = jnp.maximum(m_prev, jnp.max(s, axis=-1, keepdims=True))
        alpha = jnp.exp2(m_prev - m_new)
        p = jnp.exp2(s - m_new)                                  # (tq, tkv)

        l_scr[h] = alpha * l_scr[h] + jnp.sum(p, axis=-1, keepdims=True)
        acc_scr[h] = alpha * acc_scr[h] + jnp.dot(
            p.astype(jnp.bfloat16), v_h, preferred_element_type=jnp.float32)
        m_scr[h] = m_new

    @pl.when(ki == pl.num_programs(3) - 1)
    def _():
        parts = [acc_scr[h] * pl.reciprocal(l_scr[h], approx=True)  # EUP path
                 for h in range(heads_per_group)]
        tile = parts[0] if heads_per_group == 1 else jnp.concatenate(parts, axis=-1)
        o_ref[...] = tile.astype(o_ref.dtype)   # single lane-dense (tq, lw) store


def _head_grouping(d_model, num_heads):
    d_k = d_model // num_heads
    g = min(num_heads, max(1, 128 // d_k))
    lw = g * d_k
    if (lw % 128 != 0 and lw != d_model) or (num_heads % g != 0):
        g, lw = num_heads, d_model  # fall back: all heads share one full-width block
    return g, lw


def flash_mha(qkv, num_heads, d_model):
    packed = qkv.ndim == 4            # (3, B, S, D): general (cross-attention) path
    if packed:
        _, B, S, D = qkv.shape
    else:                             # (B, S, 3D): self-attention fast path
        B, S, D3 = qkv.shape
        D = D3 // 3
    assert D == d_model and D % num_heads == 0
    d_k = D // num_heads

    g, lw = _head_grouping(D, num_heads)
    n_hg = num_heads // g             # head-group grid extent
    nb = D // lw                      # lane blocks per q/k/v tensor (fast-path layout)

    cap = _vmem_limit_bytes()
    tq_t = 1024 if cap >= (96 << 20) else 512   # bigger q tiles on 128 MiB VMEM parts
    tq = _pick_tile(S, tq_t, 16)
    tkv = _pick_tile(S, 512, 16)
    sq_tiles, skv_tiles = S // tq, S // tkv

    # Lead with whichever independent axis offers more blocks (v7x 2-TC sharding).
    if B >= sq_tiles:
        grid = (B, n_hg, sq_tiles, skv_tiles)
        unpack = lambda g0, g1, g2, g3: (g0, g1, g2, g3)   # -> (b, hg, qi, ki)
    else:
        grid = (sq_tiles, n_hg, B, skv_tiles)
        unpack = lambda g0, g1, g2, g3: (g2, g1, g0, g3)   # -> (b, hg, qi, ki)

    if packed:
        def q_map(*gi):
            b, hg, qi, ki = unpack(*gi)
            return (0, b, qi, hg)

        def k_map(*gi):
            b, hg, qi, ki = unpack(*gi)
            return (1, b, ki, hg)

        def v_map(*gi):
            b, hg, qi, ki = unpack(*gi)
            return (2, b, ki, hg)

        in_specs = [pl.BlockSpec((None, None, tq, lw), q_map),
                    pl.BlockSpec((None, None, tkv, lw), k_map),
                    pl.BlockSpec((None, None, tkv, lw), v_map)]
    else:
        def q_map(*gi):
            b, hg, qi, ki = unpack(*gi)
            return (b, qi, hg)

        def k_map(*gi):
            b, hg, qi, ki = unpack(*gi)
            return (b, ki, nb + hg)

        def v_map(*gi):
            b, hg, qi, ki = unpack(*gi)
            return (b, ki, 2 * nb + hg)

        in_specs = [pl.BlockSpec((None, tq, lw), q_map),
                    pl.BlockSpec((None, tkv, lw), k_map),
                    pl.BlockSpec((None, tkv, lw), v_map)]

    def o_map(*gi):
        b, hg, qi, ki = unpack(*gi)
        return (b, qi, hg)

    kernel = functools.partial(_flash_mha_kernel, heads_per_group=g, d_k=d_k)
    return pl.pallas_call(
        kernel,
        out_shape=jax.ShapeDtypeStruct((B, S, D), jnp.bfloat16),
        grid=grid,
        in_specs=in_specs,
        out_specs=pl.BlockSpec((None, tq, lw), o_map),
        scratch_shapes=[
            pltpu.VMEM((g, tq, 1), jnp.float32),    # running max m (log2 domain)
            pltpu.VMEM((g, tq, 1), jnp.float32),    # running sum l
            pltpu.VMEM((g, tq, d_k), jnp.float32),  # per-head output accumulator
        ],
        compiler_params=_compiler_params(
            ("parallel", "parallel", "parallel", "arbitrary")),
    )(qkv, qkv, qkv)


# ----------------------------------------------------------------------------
# Module wrapper
# ----------------------------------------------------------------------------
class MultiHeadAttentionLayerPallas:
    """Pallas port of MultiHeadAttentionLayer: q/k/v linear -> MHA -> output linear."""

    def __init__(self, d_model, h, key, out_dtype=jnp.float32):
        assert d_model % h == 0
        self.d_model = d_model
        self.h = h
        self.d_k = d_model // h
        self.out_dtype = out_dtype

        ks = jax.random.split(key, 8)
        init = 1.0 / math.sqrt(d_model)
        wq = jax.random.normal(ks[0], (d_model, d_model), jnp.float32) * init
        bq = jax.random.normal(ks[1], (d_model,), jnp.float32) * init
        wk = jax.random.normal(ks[2], (d_model, d_model), jnp.float32) * init
        bk = jax.random.normal(ks[3], (d_model,), jnp.float32) * init
        wv = jax.random.normal(ks[4], (d_model, d_model), jnp.float32) * init
        bv = jax.random.normal(ks[5], (d_model,), jnp.float32) * init
        wo = jax.random.normal(ks[6], (d_model, d_model), jnp.float32) * init
        bo = jax.random.normal(ks[7], (d_model,), jnp.float32) * init

        # Fold the softmax scale and log2(e) (exp2 softmax) into the query
        # projection once at weight-prep time.
        qscale = (1.0 / math.sqrt(self.d_k)) * math.log2(math.e)
        wq = wq * qscale
        bq = bq * qscale

        # Stacked (3, D, D) weights for the general (cross-attention) path.
        self.w_qkv_bf16 = jnp.stack([wq, wk, wv]).astype(jnp.bfloat16)
        self.b_qkv = jnp.stack([bq, bk, bv]).reshape(3, 1, d_model)           # f32

        # Concatenated (D, 3D) weights for the self-attention fast path.
        self.w_qkv_cat_bf16 = jnp.concatenate([wq, wk, wv], axis=1).astype(jnp.bfloat16)
        self.b_qkv_cat = jnp.concatenate([bq, bk, bv]).reshape(1, 3 * d_model)  # f32

        self.wo_bf16 = wo.astype(jnp.bfloat16)
        self.bo = bo.reshape(1, d_model)                                       # f32

    def __call__(self, query, key, value, mask=None):
        # query/key/value: (B, S, d_model)
        assert mask is None  # TODO(synk): optional attention mask (and fully-masked-row guard) not implemented
        if query is key and key is value and self.d_model % 128 == 0:
            # Self-attention fast path: activation read once, one (D, 3D) matmul.
            x = query.astype(jnp.bfloat16)
            qkv = linear_projection(x, self.w_qkv_cat_bf16, self.b_qkv_cat,
                                    out_dtype=jnp.bfloat16)                  # (B, S, 3D)
        else:
            xq = query.astype(jnp.bfloat16)
            xk = key.astype(jnp.bfloat16)
            xv = value.astype(jnp.bfloat16)
            qkv = fused_qkv_projection(xq, xk, xv, self.w_qkv_bf16, self.b_qkv)  # (3,B,S,D)

        attn = flash_mha(qkv, self.h, self.d_model)                           # (B, S, D) bf16
        return linear_projection(attn, self.wo_bf16, self.bo,
                                 out_dtype=self.out_dtype)                    # (B, S, D)


# ----------------------------------------------------------------------------
# Pure-JAX reference (mirrors the kernels' bf16-operand / f32-acc / exp2 math)
# ----------------------------------------------------------------------------
def reference_forward(m, query, key, value):
    bf, f32 = jnp.bfloat16, jnp.float32
    B, S, D = query.shape
    H, dk = m.h, m.d_k

    def proj(x, w_bf, b):
        y = jnp.dot(x.astype(bf).reshape(B * S, D), w_bf,
                    preferred_element_type=f32) + b.reshape(1, D)
        return y.astype(bf).reshape(B, S, D)

    q = proj(query, m.w_qkv_bf16[0], m.b_qkv[0])   # scale*log2e already folded in
    k = proj(key,   m.w_qkv_bf16[1], m.b_qkv[1])
    v = proj(value, m.w_qkv_bf16[2], m.b_qkv[2])

    qh = q.reshape(B, S, H, dk)
    kh = k.reshape(B, S, H, dk)
    vh = v.reshape(B, S, H, dk)

    s = jnp.einsum("bqhd,bkhd->bhqk", qh, kh, preferred_element_type=f32)  # log2 domain
    mx = jnp.max(s, axis=-1, keepdims=True)
    p = jnp.exp2(s - mx)
    l = jnp.sum(p, axis=-1, keepdims=True)                                  # (B,H,Sq,1)
    pv = jnp.einsum("bhqk,bkhd->bqhd", p.astype(bf), vh,
                    preferred_element_type=f32)                             # (B,Sq,H,dk)
    attn = (pv / jnp.transpose(l, (0, 2, 1, 3))).reshape(B, S, D).astype(bf)

    out = jnp.dot(attn.reshape(B * S, D), m.wo_bf16,
                  preferred_element_type=f32) + m.bo
    return out.reshape(B, S, D).astype(m.out_dtype)


if __name__ == "__main__":
    root = jax.random.PRNGKey(0)
    k1, k2, kq, kk, kv, kx = jax.random.split(root, 6)

    # ---- Test 1: general (cross-attention) path, tiny shapes ---------------
    B, S, d_model, h = 2, 8, 32, 4
    layer = MultiHeadAttentionLayerPallas(d_model, h, k1)
    query = jax.random.normal(kq, (B, S, d_model), jnp.float32)
    key = jax.random.normal(kk, (B, S, d_model), jnp.float32)
    value = jax.random.normal(kv, (B, S, d_model), jnp.float32)

    out = jax.block_until_ready(layer(query, key, value, mask=None))
    ref = reference_forward(layer, query, key, value)
    assert out.shape == (B, S, d_model)
    err = float(jnp.max(jnp.abs(out - ref)))
    assert jnp.allclose(out, ref, atol=2e-2, rtol=2e-2), \
        f"cross-attention mismatch vs. reference (max abs err {err})"

    # ---- Test 2: self-attention fast path + d_k=64 head-group path ---------
    B2, S2, d_model2, h2 = 2, 16, 128, 2
    layer2 = MultiHeadAttentionLayerPallas(d_model2, h2, k2)
    x = jax.random.normal(kx, (B2, S2, d_model2), jnp.float32)

    out2 = jax.block_until_ready(layer2(x, x, x, mask=None))
    ref2 = reference_forward(layer2, x, x, x)
    assert out2.shape == (B2, S2, d_model2)
    err2 = float(jnp.max(jnp.abs(out2 - ref2)))
    assert jnp.allclose(out2, ref2, atol=2e-2, rtol=2e-2), \
        f"self-attention mismatch vs. reference (max abs err {err2})"

    print("KERNEL_OK")
</pallas_src>

<mosaic_0001>
module attributes {stable_mosaic.version = 11 : i64} {
  func.func @_qkv_proj_kernel(%arg0: i32, %arg1: i32, %arg2: i32, %arg3: memref<1x8x32xbf16, #tpu.memory_space<vmem>>, %arg4: memref<1x8x32xbf16, #tpu.memory_space<vmem>>, %arg5: memref<1x8x32xbf16, #tpu.memory_space<vmem>>, %arg6: memref<3x32x32xbf16, #tpu.memory_space<vmem>>, %arg7: memref<3x1x32xf32, #tpu.memory_space<vmem>>, %arg8: memref<3x1x8x32xbf16, #tpu.memory_space<vmem>>) attributes {dimension_semantics = [#tpu.dimension_semantics<parallel>, #tpu.dimension_semantics<parallel>, #tpu.dimension_semantics<parallel>], iteration_bounds = array<i64: 2, 1, 1>, scalar_prefetch = 0 : i64, scratch_operands = 0 : i64, tpu.core_type = #tpu.core_type<tc>, window_params = [{transform_indices = @transform_0, window_bounds = array<i64: 1, 8, 32>}, {transform_indices = @transform_1, window_bounds = array<i64: 1, 8, 32>}, {transform_indices = @transform_2, window_bounds = array<i64: 1, 8, 32>}, {transform_indices = @transform_3, window_bounds = array<i64: 3, 32, 32>}, {transform_indices = @transform_4, window_bounds = array<i64: 3, 1, 32>}, {transform_indices = @transform_5, window_bounds = array<i64: 3, 1, 8, 32>}]} {
    %c0 = arith.constant 0 : index
    %c0_0 = arith.constant 0 : index
    %c0_1 = arith.constant 0 : index
    %0 = vector.load %arg3[%c0, %c0_0, %c0_1] : memref<1x8x32xbf16, #tpu.memory_space<vmem>>, vector<1x8x32xbf16>
    %1 = vector.shape_cast %0 : vector<1x8x32xbf16> to vector<8x32xbf16>
    %c0_2 = arith.constant 0 : index
    %c0_3 = arith.constant 0 : index
    %c0_4 = arith.constant 0 : index
    %2 = vector.load %arg6[%c0_2, %c0_3, %c0_4] : memref<3x32x32xbf16, #tpu.memory_space<vmem>>, vector<1x32x32xbf16>
    %3 = vector.shape_cast %2 : vector<1x32x32xbf16> to vector<32x32xbf16>
    %cst = arith.constant dense<0.000000e+00> : vector<8x32xf32>
    %4 = tpu.matmul %1, %3, %cst {dimension_numbers = #tpu.dot_dimension_numbers<[1], [0], [0], [1], [0, 0, 1, 1], [], []>} : vector<8x32xbf16>, vector<32x32xbf16>, vector<8x32xf32> -> vector<8x32xf32>
    %c0_5 = arith.constant 0 : index
    %c0_6 = arith.constant 0 : index
    %c0_7 = arith.constant 0 : index
    %5 = vector.load %arg7[%c0_5, %c0_6, %c0_7] : memref<3x1x32xf32, #tpu.memory_space<vmem>>, vector<1x1x32xf32>
    %6 = vector.shape_cast %5 : vector<1x1x32xf32> to vector<1x32xf32>
    %7 = vector.broadcast %6 : vector<1x32xf32> to vector<8x32xf32>
    %8 = arith.addf %4, %7 : vector<8x32xf32>
    %9 = arith.truncf %8 : vector<8x32xf32> to vector<8x32xbf16>
    %c0_8 = arith.constant 0 : index
    %c0_9 = arith.constant 0 : index
    %c0_10 = arith.constant 0 : index
    %c0_11 = arith.constant 0 : index
    %10 = vector.load %arg8[%c0_8, %c0_9, %c0_10, %c0_11] : memref<3x1x8x32xbf16, #tpu.memory_space<vmem>>, vector<1x1x8x32xbf16>
    %11 = vector.shape_cast %10 : vector<1x1x8x32xbf16> to vector<8x32xbf16>
    %12 = vector.shape_cast %9 : vector<8x32xbf16> to vector<1x1x8x32xbf16>
    tpu.vector_store %arg8[%c0_8, %c0_9, %c0_10, %c0_11], %12 {strides = array<i32>} : memref<3x1x8x32xbf16, #tpu.memory_space<vmem>>, vector<1x1x8x32xbf16>,
    %c0_12 = arith.constant 0 : index
    %c0_13 = arith.constant 0 : index
    %c0_14 = arith.constant 0 : index
    %13 = vector.load %arg4[%c0_12, %c0_13, %c0_14] : memref<1x8x32xbf16, #tpu.memory_space<vmem>>, vector<1x8x32xbf16>
    %14 = vector.shape_cast %13 : vector<1x8x32xbf16> to vector<8x32xbf16>
    %c1 = arith.constant 1 : index
    %c0_15 = arith.constant 0 : index
    %c0_16 = arith.constant 0 : index
    %15 = vector.load %arg6[%c1, %c0_15, %c0_16] : memref<3x32x32xbf16, #tpu.memory_space<vmem>>, vector<1x32x32xbf16>
    %16 = vector.shape_cast %15 : vector<1x32x32xbf16> to vector<32x32xbf16>
    %cst_17 = arith.constant dense<0.000000e+00> : vector<8x32xf32>
    %17 = tpu.matmul %14, %16, %cst_17 {dimension_numbers = #tpu.dot_dimension_numbers<[1], [0], [0], [1], [0, 0, 1, 1], [], []>} : vector<8x32xbf16>, vector<32x32xbf16>, vector<8x32xf32> -> vector<8x32xf32>
    %c1_18 = arith.constant 1 : index
    %c0_19 = arith.constant 0 : index
    %c0_20 = arith.constant 0 : index
    %18 = vector.load %arg7[%c1_18, %c0_19, %c0_20] : memref<3x1x32xf32, #tpu.memory_space<vmem>>, vector<1x1x32xf32>
    %19 = vector.shape_cast %18 : vector<1x1x32xf32> to vector<1x32xf32>
    %20 = vector.broadcast %19 : vector<1x32xf32> to vector<8x32xf32>
    %21 = arith.addf %17, %20 : vector<8x32xf32>
    %22 = arith.truncf %21 : vector<8x32xf32> to vector<8x32xbf16>
    %c1_21 = arith.constant 1 : index
    %c0_22 = arith.constant 0 : index
    %c0_23 = arith.constant 0 : index
    %c0_24 = arith.constant 0 : index
    %23 = vector.load %arg8[%c1_21, %c0_22, %c0_23, %c0_24] : memref<3x1x8x32xbf16, #tpu.memory_space<vmem>>, vector<1x1x8x32xbf16>
    %24 = vector.shape_cast %23 : vector<1x1x8x32xbf16> to vector<8x32xbf16>
    %25 = vector.shape_cast %22 : vector<8x32xbf16> to vector<1x1x8x32xbf16>
    tpu.vector_store %arg8[%c1_21, %c0_22, %c0_23, %c0_24], %25 {strides = array<i32>} : memref<3x1x8x32xbf16, #tpu.memory_space<vmem>>, vector<1x1x8x32xbf16>,
    %c0_25 = arith.constant 0 : index
    %c0_26 = arith.constant 0 : index
    %c0_27 = arith.constant 0 : index
    %26 = vector.load %arg5[%c0_25, %c0_26, %c0_27] : memref<1x8x32xbf16, #tpu.memory_space<vmem>>, vector<1x8x32xbf16>
    %27 = vector.shape_cast %26 : vector<1x8x32xbf16> to vector<8x32xbf16>
    %c2 = arith.constant 2 : index
    %c0_28 = arith.constant 0 : index
    %c0_29 = arith.constant 0 : index
    %28 = vector.load %arg6[%c2, %c0_28, %c0_29] : memref<3x32x32xbf16, #tpu.memory_space<vmem>>, vector<1x32x32xbf16>
    %29 = vector.shape_cast %28 : vector<1x32x32xbf16> to vector<32x32xbf16>
    %cst_30 = arith.constant dense<0.000000e+00> : vector<8x32xf32>
    %30 = tpu.matmul %27, %29, %cst_30 {dimension_numbers = #tpu.dot_dimension_numbers<[1], [0], [0], [1], [0, 0, 1, 1], [], []>} : vector<8x32xbf16>, vector<32x32xbf16>, vector<8x32xf32> -> vector<8x32xf32>
    %c2_31 = arith.constant 2 : index
    %c0_32 = arith.constant 0 : index
    %c0_33 = arith.constant 0 : index
    %31 = vector.load %arg7[%c2_31, %c0_32, %c0_33] : memref<3x1x32xf32, #tpu.memory_space<vmem>>, vector<1x1x32xf32>
    %32 = vector.shape_cast %31 : vector<1x1x32xf32> to vector<1x32xf32>
    %33 = vector.broadcast %32 : vector<1x32xf32> to vector<8x32xf32>
    %34 = arith.addf %30, %33 : vector<8x32xf32>
    %35 = arith.truncf %34 : vector<8x32xf32> to vector<8x32xbf16>
    %c2_34 = arith.constant 2 : index
    %c0_35 = arith.constant 0 : index
    %c0_36 = arith.constant 0 : index
    %c0_37 = arith.constant 0 : index
    %36 = vector.load %arg8[%c2_34, %c0_35, %c0_36, %c0_37] : memref<3x1x8x32xbf16, #tpu.memory_space<vmem>>, vector<1x1x8x32xbf16>
    %37 = vector.shape_cast %36 : vector<1x1x8x32xbf16> to vector<8x32xbf16>
    %38 = vector.shape_cast %35 : vector<8x32xbf16> to vector<1x1x8x32xbf16>
    tpu.vector_store %arg8[%c2_34, %c0_35, %c0_36, %c0_37], %38 {strides = array<i32>} : memref<3x1x8x32xbf16, #tpu.memory_space<vmem>>, vector<1x1x8x32xbf16>,
    return
  }
  func.func @transform_0(%arg0: i32, %arg1: i32, %arg2: i32) -> (i32, i32, i32) {
    %c0_i32 = arith.constant 0 : i32
    %c0_i32_0 = arith.constant 0 : i32
    return %arg0, %arg2, %c0_i32 : i32, i32, i32
  }
  func.func @transform_1(%arg0: i32, %arg1: i32, %arg2: i32) -> (i32, i32, i32) {
    %c0_i32 = arith.constant 0 : i32
    %c0_i32_0 = arith.constant 0 : i32
    return %arg0, %arg2, %c0_i32 : i32, i32, i32
  }
  func.func @transform_2(%arg0: i32, %arg1: i32, %arg2: i32) -> (i32, i32, i32) {
    %c0_i32 = arith.constant 0 : i32
    %c0_i32_0 = arith.constant 0 : i32
    return %arg0, %arg2, %c0_i32 : i32, i32, i32
  }
  func.func @transform_3(%arg0: i32, %arg1: i32, %arg2: i32) -> (i32, i32, i32) {
    %c0_i32 = arith.constant 0 : i32
    %c0_i32_0 = arith.constant 0 : i32
    %c0_i32_1 = arith.constant 0 : i32
    return %c0_i32, %c0_i32_0, %arg1 : i32, i32, i32
  }
  func.func @transform_4(%arg0: i32, %arg1: i32, %arg2: i32) -> (i32, i32, i32) {
    %c0_i32 = arith.constant 0 : i32
    %c0_i32_0 = arith.constant 0 : i32
    %c0_i32_1 = arith.constant 0 : i32
    return %c0_i32, %c0_i32_0, %arg1 : i32, i32, i32
  }
  func.func @transform_5(%arg0: i32, %arg1: i32, %arg2: i32) -> (i32, i32, i32, i32) {
    %c0_i32 = arith.constant 0 : i32
    %c0_i32_0 = arith.constant 0 : i32
    return %c0_i32, %arg0, %arg2, %arg1 : i32, i32, i32, i32
  }
}

</mosaic_0001>

<llo_original>
// kernel: tpu_custom_call.1
$region0: #{tpu_custom_call.1}
  #allocation0 [shape = 'u32[]', space=smem, size = 0x4, offset = 0x4, fixed_abs, tag = 'smem constant byte address 0x4 - core index']
  #allocation1 [shape = 'u32[144,128]{1,0:T(1,128)}', space=vmem, size = 0x12000, scoped, tag = 'internal scratch']
  %s0 = inlined_call_operand.hbm [shape: bf16[2,8,32], index: 0, kind: input, shape index: {}]
  %s1 = inlined_call_operand.hbm [shape: bf16[2,8,32], index: 1, kind: input, shape index: {}]
  %s2 = inlined_call_operand.hbm [shape: bf16[2,8,32], index: 2, kind: input, shape index: {}]
  %s3 = inlined_call_operand.hbm [shape: bf16[3,32,32], index: 3, kind: input, shape index: {}]
  %s4 = inlined_call_operand.vmem [shape: f32[3,1,32], index: 4, kind: input, shape index: {}]
  %s5 = inlined_call_operand.hbm [shape: bf16[3,2,8,32], index: 5, kind: output, shape index: {}]
  %s6 = sld [smem:[#allocation0]]
  $region69: #{tpu_custom_call.1} parent=0
    _
  %s8 = ssub.s32 1, %s6
  %s9 = scalar_select 0, %s8, %s6
  $region1: #{tpu_custom_call.1} parent=0
    #allocation2 [shape = 'u8[4096]{0}', space=vmem, size = 0x1000, scoped, tag = 'input window, operand 0']
    #allocation3 [shape = 's32[2]{0}', space=sflag, size = 0x8, scoped, tag = 'scoped memory for tpu_custom_call.1']
    #allocation4 [shape = 's32[2]{0}', space=sflag, size = 0x8, scoped, tag = 'scoped memory for tpu_custom_call.1']
    #allocation5 [shape = 'u8[4096]{0}', space=vmem, size = 0x1000, scoped, tag = 'input window, operand 1']
    #allocation6 [shape = 's32[2]{0}', space=sflag, size = 0x8, scoped, tag = 'scoped memory for tpu_custom_call.1']
    #allocation7 [shape = 'u8[4096]{0}', space=vmem, size = 0x1000, scoped, tag = 'input window, operand 2']
    #allocation8 [shape = 'u8[24576]{0}', space=vmem, size = 0x6000, scoped, tag = 'input window, operand 3, single buffered']
    #allocation9 [shape = 's32[1]{0}', space=sflag, size = 0x4, scoped, tag = 'scoped memory for tpu_custom_call.1']
    #allocation10 [shape = 'u8[12288]{0}', space=vmem, size = 0x3000, scoped, tag = 'output window, operand 0']
    %10 = vsyncpa [#allocation3], 0
    %s11 = scalar_lea.sflag [#allocation3], 1
    %12 = vsyncpa %s11, 0
    %13 = vsyncpa [#allocation6], 0
    %s14 = scalar_lea.sflag [#allocation6], 1
    %15 = vsyncpa %s14, 0
    %16 = vsyncpa [#allocation9], 0
    %17 = vsyncpa [#allocation4], 0
    %s18 = scalar_lea.sflag [#allocation4], 1
    %19 = vsyncpa %s18, 0
    loop: start=0, step=1, limit=4
    $region2: #{tpu_custom_call.1} parent=1 // loop_pre_header
      _
    $region3: #{tpu_custom_call.1} parent=1 // loop_header
      %s21 = sphi 0, %s25
      %p22 = scmp.ge.s32.totalorder %s21, 4
      %s28 = sphi 0, %s47
      %s29 = sphi 0, %s43
      %s30 = sphi 0, %s39
      %s31 = sphi 0, %s28
      %s32 = sphi 0, %s29
      %s33 = sphi 0, %s30
      %s34 = sphi 0, %s31
      %s35 = sphi 0, %s32
      %s36 = sphi 0, %s33
      %s52 = sphi 0, %s54
      %s55 = sphi 0, %s52
      %s56 = sphi 0, %s55
      %s72 = sphi 0, %s56
      %s80 = sphi 0, %s82
      %s83 = sphi 0, %s80
      %s84 = sphi 0, %s83
      %s100 = sphi 0, %s84
      %s108 = sphi 0, %s110
      %s111 = sphi 0, %s108
      %s112 = sphi 0, %s111
      %s128 = sphi 0, %s112
      %s134 = sphi 0, %s136
      %s137 = sphi 0, %s134
      %s138 = sphi 0, %s137
      %s154 = sphi 0, %s138
      %s160 = sphi 0, %s162
      %s163 = sphi 0, %s160
      %s164 = sphi 0, %s163
      %s180 = sphi 0, %s164
      %s190 = sphi 0, %s192
      %s193 = sphi 0, %s190
      %s194 = sphi 0, %s193
      %s210 = sphi 0, %s194
    $region4: #{tpu_custom_call.1} parent=1 // loop_header_branch
      %24 = sbr.rel (%p22) target = $region8
    $region5: #{tpu_custom_call.1} parent=1 // loop_body
      %s26 = ssub.s32 %s21, 1
      %s27 = ssub.s32 %s21, 2
      %s37 = sadd.s32 1, %s30
      %p38 = scmp.ge.s32.totalorder %s37, 1
      %s39 = scalar_select %p38, 0, %s37
      %s40 = sadd.s32 1, %s29
      %s41 = scalar_select %p38, %s40, %s29
      %p42 = scmp.ge.s32.totalorder %s41, 1
      %s43 = scalar_select %p42, 0, %s41
      %s44 = sadd.s32 1, %s28
      %s45 = scalar_select %p42, %s44, %s28
      %p46 = scmp.ge.s32.totalorder %s45, 2
      %s47 = scalar_select %p46, 0, %s45
      %s48 = ssub.s32 %s28, %s47
      %s49 = ssub.s32 %s30, %s39
      %s50 = sor.u32 %s48, %s49
      %p51 = scmp.eq.s32.totalorder %s50, 0
      %s53 = sadd.s32 %s52, 1
      %s54 = scalar_select %p51, %s52, %s53
      %p57 = pneg %p51
      %p58 = scmp.eq.s32.totalorder %s21, 1
      %p59 = por %p57, %p58
      %p60 = scmp.ne.s32.totalorder %s52, %s55
      %p61 = scmp.eq.s32.totalorder %s21, 0
      %p62 = por %p60, %p61
      %p63 = scmp.ne.s32.totalorder %s52, %s55
      %p64 = scmp.eq.s32.totalorder %s26, 1
      %p65 = por %p63, %p64
      %p66 = scmp.ne.s32.totalorder %s55, %s56
      %p67 = scmp.eq.s32.totalorder %s26, 0
      %p68 = por %p66, %p67
      %p69 = scmp.ne.s32.totalorder %s55, %s56
      %p70 = scmp.eq.s32.totalorder %s27, 1
      %p71 = por %p69, %p70
      %p73 = scmp.ne.s32.totalorder %s56, %s72
      %p74 = scmp.eq.s32.totalorder %s27, 0
      %p75 = por %p73, %p74
      %s76 = ssub.s32 %s28, %s47
      %s77 = ssub.s32 %s30, %s39
      %s78 = sor.u32 %s76, %s77
      %p79 = scmp.eq.s32.totalorder %s78, 0
      %s81 = sadd.s32 %s80, 1
      %s82 = scalar_select %p79, %s80, %s81
      %p85 = pneg %p79
      %p86 = scmp.eq.s32.totalorder %s21, 1
      %p87 = por %p85, %p86
      %p88 = scmp.ne.s32.totalorder %s80, %s83
      %p89 = scmp.eq.s32.totalorder %s21, 0
      %p90 = por %p88, %p89
      %p91 = scmp.ne.s32.totalorder %s80, %s83
      %p92 = scmp.eq.s32.totalorder %s26, 1
      %p93 = por %p91, %p92
      %p94 = scmp.ne.s32.totalorder %s83, %s84
      %p95 = scmp.eq.s32.totalorder %s26, 0
      %p96 = por %p94, %p95
      %p97 = scmp.ne.s32.totalorder %s83, %s84
      %p98 = scmp.eq.s32.totalorder %s27, 1
      %p99 = por %p97, %p98
      %p101 = scmp.ne.s32.totalorder %s84, %s100
      %p102 = scmp.eq.s32.totalorder %s27, 0
      %p103 = por %p101, %p102
      %s104 = ssub.s32 %s28, %s47
      %s105 = ssub.s32 %s30, %s39
      %s106 = sor.u32 %s104, %s105
      %p107 = scmp.eq.s32.totalorder %s106, 0
      %s109 = sadd.s32 %s108, 1
      %s110 = scalar_select %p107, %s108, %s109
      %p113 = pneg %p107
      %p114 = scmp.eq.s32.totalorder %s21, 1
      %p115 = por %p113, %p114
      %p116 = scmp.ne.s32.totalorder %s108, %s111
      %p117 = scmp.eq.s32.totalorder %s21, 0
      %p118 = por %p116, %p117
      %p119 = scmp.ne.s32.totalorder %s108, %s111
      %p120 = scmp.eq.s32.totalorder %s26, 1
      %p121 = por %p119, %p120
      %p122 = scmp.ne.s32.totalorder %s111, %s112
      %p123 = scmp.eq.s32.totalorder %s26, 0
      %p124 = por %p122, %p123
      %p125 = scmp.ne.s32.totalorder %s111, %s112
      %p126 = scmp.eq.s32.totalorder %s27, 1
      %p127 = por %p125, %p126
      %p129 = scmp.ne.s32.totalorder %s112, %s128
      %p130 = scmp.eq.s32.totalorder %s27, 0
      %p131 = por %p129, %p130
      %s132 = ssub.s32 %s29, %s43
      %p133 = scmp.eq.s32.totalorder %s132, 0
      %s135 = sadd.s32 %s134, 1
      %s136 = scalar_select %p133, %s134, %s135
      %p139 = pneg %p133
      %p140 = scmp.eq.s32.totalorder %s21, 1
      %p141 = por %p139, %p140
      %p142 = scmp.ne.s32.totalorder %s134, %s137
      %p143 = scmp.eq.s32.totalorder %s21, 0
      %p144 = por %p142, %p143
      %p145 = scmp.ne.s32.totalorder %s134, %s137
      %p146 = scmp.eq.s32.totalorder %s26, 1
      %p147 = por %p145, %p146
      %p148 = scmp.ne.s32.totalorder %s137, %s138
      %p149 = scmp.eq.s32.totalorder %s26, 0
      %p150 = por %p148, %p149
      %p151 = scmp.ne.s32.totalorder %s137, %s138
      %p152 = scmp.eq.s32.totalorder %s27, 1
      %p153 = por %p151, %p152
      %p155 = scmp.ne.s32.totalorder %s138, %s154
      %p156 = scmp.eq.s32.totalorder %s27, 0
      %p157 = por %p155, %p156
      %s158 = ssub.s32 %s29, %s43
      %p159 = scmp.eq.s32.totalorder %s158, 0
      %s161 = sadd.s32 %s160, 1
      %s162 = scalar_select %p159, %s160, %s161
      %p165 = pneg %p159
      %p166 = scmp.eq.s32.totalorder %s21, 1
      %p167 = por %p165, %p166
      %p168 = scmp.ne.s32.totalorder %s160, %s163
      %p169 = scmp.eq.s32.totalorder %s21, 0
      %p170 = por %p168, %p169
      %p171 = scmp.ne.s32.totalorder %s160, %s163
      %p172 = scmp.eq.s32.totalorder %s26, 1
      %p173 = por %p171, %p172
      %p174 = scmp.ne.s32.totalorder %s163, %s164
      %p175 = scmp.eq.s32.totalorder %s26, 0
      %p176 = por %p174, %p175
      %p177 = scmp.ne.s32.totalorder %s163, %s164
      %p178 = scmp.eq.s32.totalorder %s27, 1
      %p179 = por %p177, %p178
      %p181 = scmp.ne.s32.totalorder %s164, %s180
      %p182 = scmp.eq.s32.totalorder %s27, 0
      %p183 = por %p181, %p182
      %s184 = ssub.s32 %s28, %s47
      %s185 = ssub.s32 %s30, %s39
      %s186 = sor.u32 %s184, %s185
      %s187 = ssub.s32 %s29, %s43
      %s188 = sor.u32 %s186, %s187
      %p189 = scmp.eq.s32.totalorder %s188, 0
      %s191 = sadd.s32 %s190, 1
      %s192 = scalar_select %p189, %s190, %s191
      %p195 = pneg %p189
      %p196 = scmp.eq.s32.totalorder %s21, 1
      %p197 = por %p195, %p196
      %p198 = scmp.ne.s32.totalorder %s190, %s193
      %p199 = scmp.eq.s32.totalorder %s21, 0
      %p200 = por %p198, %p199
      %p201 = scmp.ne.s32.totalorder %s190, %s193
      %p202 = scmp.eq.s32.totalorder %s26, 1
      %p203 = por %p201, %p202
      %p204 = scmp.ne.s32.totalorder %s193, %s194
      %p205 = scmp.eq.s32.totalorder %s26, 0
      %p206 = por %p204, %p205
      %p207 = scmp.ne.s32.totalorder %s193, %s194
      %p208 = scmp.eq.s32.totalorder %s27, 1
      %p209 = por %p207, %p208
      %p211 = scmp.ne.s32.totalorder %s194, %s210
      %p212 = scmp.eq.s32.totalorder %s27, 0
      %p213 = por %p211, %p212
      %p214 = scmp.le.s32.totalorder 1, %s21
      %p215 = scmp.lt.s32.totalorder %s21, 3
      %p216 = pnand %p214, %p215
      %p217 = pneg %p216
      // Predicated region
      $region9: #{tpu_custom_call.1} parent=5 // pred_check
        _
      $region10: #{tpu_custom_call.1} parent=5 // pred_check_branch
        %219 = sbr.rel (%p216) target = $region12
      $region11: #{tpu_custom_call.1} parent=5 // pred_region
        %s220 = ssub.s32 %s21, 1
        // Predicated region
        $region13: #{tpu_custom_call.1} parent=11 // pred_check
          %p221 = pneg %p150
        $region14: #{tpu_custom_call.1} parent=11 // pred_check_branch
          %223 = sbr.rel (%p221) target = $region16
        $region15: #{tpu_custom_call.1} parent=11 // pred_region
          %s225 = ssub.s32 768, 768
          %226 = vsyncadd [#allocation9], %s225
          %s227 = smul.addr %s32, 64
          %s228 = scalar_lea.hbm %s3, %s227
          %s229 = sshll.u32 [#allocation8], 4
          %s230 = int_to_ptr.vmem [resolvable:$true] %s229
          %235 = dma.hbm_to_vmem [thread:$0]  %s228, 768, %s230, [#allocation9], 64, 64, 4
        $region16: #{tpu_custom_call.1} parent=11 // pred_fallthru
          _
        // Predicated region
        $region17: #{tpu_custom_call.1} parent=11 // pred_check
          %p236 = pneg %p176
        $region18: #{tpu_custom_call.1} parent=11 // pred_check_branch
          %238 = sbr.rel (%p236) target = $region20
        $region19: #{tpu_custom_call.1} parent=11 // pred_region
          %p239 = scmp.lt.s32.totalorder %s32, 0
          %s240 = scalar_select %p239, %s32, 0
          %s241 = scalar_lea.vmem %s4, %s240
        $region20: #{tpu_custom_call.1} parent=11 // pred_fallthru
          _
      $region12: #{tpu_custom_call.1} parent=5 // pred_fallthru
        _
      %p242 = scmp.lt.s32.totalorder %s21, 2
      // Predicated region
      $region21: #{tpu_custom_call.1} parent=5 // pred_check
        %p243 = pneg %p242
      $region22: #{tpu_custom_call.1} parent=5 // pred_check_branch
        %245 = sbr.rel (%p243) target = $region24
      $region23: #{tpu_custom_call.1} parent=5 // pred_region
        // Predicated region
        $region25: #{tpu_custom_call.1} parent=23 // pred_check
          %p246 = pneg %p62
        $region26: #{tpu_custom_call.1} parent=23 // pred_check_branch
          %248 = sbr.rel (%p246) target = $region28
        $region27: #{tpu_custom_call.1} parent=23 // pred_region
          %s249 = sand.u32 %s52, 1
          %s250 = scalar_lea.sflag [#allocation3], %s249
          %s251 = sand.u32 %s52, 1
          %s252 = smul.addr %s251, 4
          %s253 = scalar_lea.vmem [#allocation2], %s252
          %s255 = ssub.s32 64, 64
          %256 = vsyncadd %s250, %s255
          %s257 = sadd.s32 %s30, %s28
          %s258 = smul.addr %s257, 64
          %s259 = scalar_lea.hbm %s0, %s258
          %s261 = sshll.u32 %s253, 4
          %s262 = int_to_ptr.vmem [resolvable:$true] %s261
          %264 = dma.hbm_to_vmem [thread:$0]  %s259, 64, %s262, %s250
        $region28: #{tpu_custom_call.1} parent=23 // pred_fallthru
          _
        // Predicated region
        $region29: #{tpu_custom_call.1} parent=23 // pred_check
          %p265 = pneg %p90
        $region30: #{tpu_custom_call.1} parent=23 // pred_check_branch
          %267 = sbr.rel (%p265) target = $region32
        $region31: #{tpu_custom_call.1} parent=23 // pred_region
          %s268 = sand.u32 %s21, 1
          %s269 = scalar_lea.sflag [#allocation6], %s268
          %s270 = sand.u32 %s80, 1
          %s271 = smul.addr %s270, 4
          %s272 = scalar_lea.vmem [#allocation5], %s271
          %s274 = ssub.s32 64, 64
          %275 = vsyncadd %s269, %s274
          %s276 = sadd.s32 %s30, %s28
          %s277 = smul.addr %s276, 64
          %s278 = scalar_lea.hbm %s1, %s277
          %s280 = sshll.u32 %s272, 4
          %s281 = int_to_ptr.vmem [resolvable:$true] %s280
          %283 = dma.hbm_to_vmem [thread:$0]  %s278, 64, %s281, %s269
        $region32: #{tpu_custom_call.1} parent=23 // pred_fallthru
          _
        // Predicated region
        $region33: #{tpu_custom_call.1} parent=23 // pred_check
          %p284 = pneg %p118
        $region34: #{tpu_custom_call.1} parent=23 // pred_check_branch
          %286 = sbr.rel (%p284) target = $region36
        $region35: #{tpu_custom_call.1} parent=23 // pred_region
          %s287 = sand.u32 %s21, 1
          %s288 = scalar_lea.sflag [#allocation6], %s287
          %s289 = sand.u32 %s108, 1
          %s290 = smul.addr %s289, 4
          %s291 = scalar_lea.vmem [#allocation7], %s290
          %s293 = ssub.s32 64, 64
          %294 = vsyncadd %s288, %s293
          %s295 = sadd.s32 %s30, %s28
          %s296 = smul.addr %s295, 64
          %s297 = scalar_lea.hbm %s2, %s296
          %s299 = sshll.u32 %s291, 4
          %s300 = int_to_ptr.vmem [resolvable:$true] %s299
          %302 = dma.hbm_to_vmem [thread:$0]  %s297, 64, %s300, %s288
        $region36: #{tpu_custom_call.1} parent=23 // pred_fallthru
          _
      $region24: #{tpu_custom_call.1} parent=5 // pred_fallthru
        _
      %p303 = scmp.le.s32.totalorder 1, %s21
      %p304 = scmp.lt.s32.totalorder %s21, 3
      %p305 = pnand %p303, %p304
      %p306 = pneg %p305
      // Predicated region
      $region37: #{tpu_custom_call.1} parent=5 // pred_check
        _
      $region38: #{tpu_custom_call.1} parent=5 // pred_check_branch
        %308 = sbr.rel (%p305) target = $region40
      $region39: #{tpu_custom_call.1} parent=5 // pred_region
        %s309 = ssub.s32 %s21, 1
        %s310 = sand.u32 %s55, 1
        %s311 = scalar_lea.sflag [#allocation3], %s310
        %s312 = sand.u32 %s55, 1
        %s313 = smul.addr %s312, 4
        %s314 = scalar_lea.vmem [#allocation2], %s313
        // Predicated region
        $region41: #{tpu_custom_call.1} parent=39 // pred_check
          %p315 = pneg %p68
        $region42: #{tpu_custom_call.1} parent=39 // pred_check_branch
          %317 = sbr.rel (%p315) target = $region44
        $region43: #{tpu_custom_call.1} parent=39 // pred_region
          %318 = dma.done %s311, 64
        $region44: #{tpu_custom_call.1} parent=39 // pred_fallthru
          _
        %s319 = sand.u32 %s26, 1
        %s320 = scalar_lea.sflag [#allocation6], %s319
        %s321 = sand.u32 %s83, 1
        %s322 = smul.addr %s321, 4
        %s323 = scalar_lea.vmem [#allocation5], %s322
        // Predicated region
        $region45: #{tpu_custom_call.1} parent=39 // pred_check
          %p324 = pneg %p96
        $region46: #{tpu_custom_call.1} parent=39 // pred_check_branch
          %326 = sbr.rel (%p324) target = $region48
        $region47: #{tpu_custom_call.1} parent=39 // pred_region
          %327 = dma.done %s320, 64
        $region48: #{tpu_custom_call.1} parent=39 // pred_fallthru
          _
        %s328 = sand.u32 %s26, 1
        %s329 = scalar_lea.sflag [#allocation6], %s328
        %s330 = sand.u32 %s111, 1
        %s331 = smul.addr %s330, 4
        %s332 = scalar_lea.vmem [#allocation7], %s331
        // Predicated region
        $region49: #{tpu_custom_call.1} parent=39 // pred_check
          %p333 = pneg %p124
        $region50: #{tpu_custom_call.1} parent=39 // pred_check_branch
          %335 = sbr.rel (%p333) target = $region52
        $region51: #{tpu_custom_call.1} parent=39 // pred_region
          %336 = dma.done %s329, 64
        $region52: #{tpu_custom_call.1} parent=39 // pred_fallthru
          _
        // Predicated region
        $region53: #{tpu_custom_call.1} parent=39 // pred_check
          %p337 = pneg %p150
        $region54: #{tpu_custom_call.1} parent=39 // pred_check_branch
          %339 = sbr.rel (%p337) target = $region56
        $region55: #{tpu_custom_call.1} parent=39 // pred_region
          %340 = dma.done [#allocation9], 768
        $region56: #{tpu_custom_call.1} parent=39 // pred_fallthru
          _
        %s341 = sand.u32 %s55, 1
        %s342 = scalar_lea.sflag [#allocation3], %s341
        %s343 = sand.u32 %s55, 1
        %s344 = smul.addr %s343, 4
        %s345 = scalar_lea.vmem [#allocation2], %s344
        %p346 = pneg %p68
        %p347 = pneg %p65
        %s348 = sand.u32 %s26, 1
        %s349 = scalar_lea.sflag [#allocation6], %s348
        %s350 = sand.u32 %s83, 1
        %s351 = smul.addr %s350, 4
        %s352 = scalar_lea.vmem [#allocation5], %s351
        %p353 = pneg %p96
        %p354 = pneg %p93
        %s355 = sand.u32 %s26, 1
        %s356 = scalar_lea.sflag [#allocation6], %s355
        %s357 = sand.u32 %s111, 1
        %s358 = smul.addr %s357, 4
        %s359 = scalar_lea.vmem [#allocation7], %s358
        %p360 = pneg %p124
        %p361 = pneg %p121
        %p362 = pneg %p150
        %p363 = pneg %p147
        %p364 = scmp.lt.s32.totalorder %s32, 0
        %s365 = scalar_select %p364, %s32, 0
        %s366 = scalar_lea.vmem %s4, %s365
        %p367 = pneg %p176
        %p368 = pneg %p173
        %p369 = pneg %p206
        %p370 = pneg %p203
        %s371 = sand.u32 %s193, 1
        %s372 = scalar_lea.sflag [#allocation4], %s371
        %s373 = sand.u32 %s193, 1
        %s374 = smul.addr %s373, 12
        %s375 = scalar_lea.vmem [#allocation10], %s374
        %p376 = scmp.lt.s32.totalorder %s32, 0
        %s377 = scalar_select %p376, %s32, 0
        %s378 = scalar_lea.vmem %s4, %s377
        %v380 = vld [vmem:[%s314] sm:$0xf]
        %v381 = vld [vmem:[#allocation8] sm:$0xf]
        %v382 = vld [vmem:[#allocation8 + $0x4] sm:$0xf]
        %v383 = vld [vmem:[#allocation8 + $0x8] sm:$0xf]
        %v384 = vld [vmem:[#allocation8 + $0xc] sm:$0xf]
        %v385 = vld [vmem:[%s378] sm:$0x1]
        %v387 = vlaneseq
        %v388 = vshrl.u32 %v387, 7
        %v389 = vsub.s32 0, %v388
        %v390 = vrot.slane %v385, %v389
        %v396 = vunpack.c.l.b16 %v381
        %v397 = vunpack.c.l.b16 %v382
        %v398 = vunpack.c.l.b16 %v383
        %v399 = vunpack.c.l.b16 %v384
        %v400 = vpack.c.b16 %v397, %v396
        %v401 = vpack.c.b16 %v399, %v398
        %vm404 = vcmask 261120
        %v406 = vsel %vm404, %v380, 0
        %408 = vmatprep.subr.bf16.mxu0 0
        %409 = vmatpush1.bf16.msra.mxu0 %v400
        %410 = vmatprep.subr.bf16.mxu0 0
        %411 = vmatpush1.bf16.msra.mxu0 %v401
        %412 = vmatprep.subr.bf16.mxu0 0
        %413 = vmatpush1.bf16.msra.mxu0 0
        %414 = vmatprep.subr.bf16.mxu0 0
        %415 = vmatpush1.bf16.msra.mxu0 0
        %416 = vmatprep.subr.bf16.mxu0 0
        %417 = vmatpush1.bf16.msra.mxu0 0
        %418 = vmatprep.subr.bf16.mxu0 0
        %419 = vmatpush1.bf16.msra.mxu0 0
        %420 = vmatprep.subr.bf16.mxu0 0
        %421 = vmatpush1.bf16.msra.mxu0 0
        %422 = vmatprep.subr.bf16.mxu0 0
        %423 = vmatpush1.bf16.msra.mxu0 0
        %424 = vmatprep.subr.bf16.mxu0 0
        %425 = vmatpush1.bf16.msra.mxu0 0
        %426 = vmatprep.subr.bf16.mxu0 0
        %427 = vmatpush1.bf16.msra.mxu0 0
        %428 = vmatprep.subr.bf16.mxu0 0
        %429 = vmatpush1.bf16.msra.mxu0 0
        %430 = vmatprep.subr.bf16.mxu0 0
        %431 = vmatpush1.bf16.msra.mxu0 0
        %432 = vmatprep.subr.bf16.mxu0 0
        %433 = vmatpush1.bf16.msra.mxu0 0
        %434 = vmatprep.subr.bf16.mxu0 0
        %435 = vmatpush1.bf16.msra.mxu0 0
        %436 = vmatprep.subr.bf16.mxu0 0
        %437 = vmatpush1.bf16.msra.mxu0 0
        %438 = vmatprep.subr.bf16.mxu0 0
        %439 = vmatpush1.bf16.msra.mxu0 0
        %440 = vmatprep.mubr.bf16.mxu0 0
        %441 = vmatmul.mubr.bf16.gmra.mrb[0].mxu0 %v406
        %v442 = vpop.f32.mrb[0].mxu0
        %v443 = vadd.f32 %v390, %v442
        %v444 = vpop.f32.mrb[0].mxu0
        %v445 = vpop.f32.mrb[0].mxu0
        %v446 = vpop.f32.mrb[0].mxu0
        %447 = vdwg.mxu0
        %v448 = vpack.c.bf16 %v443, %v443
        %vm449 = vcmask 257024
        %450 = vst.msk [vmem:[%s375] sm:$0xf] %vm449, %v448
        %v451 = vld [vmem:[%s323] sm:$0xf]
        %s452 = scalar_lea.vmem [#allocation8], 16
        %v453 = vld [vmem:[%s452] sm:$0xf]
        %v454 = vld [vmem:[%s452 + $0x4] sm:$0xf]
        %v455 = vld [vmem:[%s452 + $0x8] sm:$0xf]
        %v456 = vld [vmem:[%s452 + $0xc] sm:$0xf]
        %s457 = scalar_lea.vmem %s378, 1
        %v458 = vld [vmem:[%s457] sm:$0x1]
        %v460 = vlaneseq
        %v461 = vshrl.u32 %v460, 7
        %v462 = vsub.s32 0, %v461
        %v463 = vrot.slane %v458, %v462
        %v469 = vunpack.c.l.b16 %v453
        %v470 = vunpack.c.l.b16 %v454
        %v471 = vunpack.c.l.b16 %v455
        %v472 = vunpack.c.l.b16 %v456
        %v473 = vpack.c.b16 %v470, %v469
        %v474 = vpack.c.b16 %v472, %v471
        %v478 = vsel %vm404, %v451, 0
        %480 = vmatprep.subr.bf16.mxu0 0
        %481 = vmatpush1.bf16.msra.mxu0 %v473
        %482 = vmatprep.subr.bf16.mxu0 0
        %483 = vmatpush1.bf16.msra.mxu0 %v474
        %484 = vmatprep.subr.bf16.mxu0 0
        %485 = vmatpush1.bf16.msra.mxu0 0
        %486 = vmatprep.subr.bf16.mxu0 0
        %487 = vmatpush1.bf16.msra.mxu0 0
        %488 = vmatprep.subr.bf16.mxu0 0
        %489 = vmatpush1.bf16.msra.mxu0 0
        %490 = vmatprep.subr.bf16.mxu0 0
        %491 = vmatpush1.bf16.msra.mxu0 0
        %492 = vmatprep.subr.bf16.mxu0 0
        %493 = vmatpush1.bf16.msra.mxu0 0
        %494 = vmatprep.subr.bf16.mxu0 0
        %495 = vmatpush1.bf16.msra.mxu0 0
        %496 = vmatprep.subr.bf16.mxu0 0
        %497 = vmatpush1.bf16.msra.mxu0 0
        %498 = vmatprep.subr.bf16.mxu0 0
        %499 = vmatpush1.bf16.msra.mxu0 0
        %500 = vmatprep.subr.bf16.mxu0 0
        %501 = vmatpush1.bf16.msra.mxu0 0
        %502 = vmatprep.subr.bf16.mxu0 0
        %503 = vmatpush1.bf16.msra.mxu0 0
        %504 = vmatprep.subr.bf16.mxu0 0
        %505 = vmatpush1.bf16.msra.mxu0 0
        %506 = vmatprep.subr.bf16.mxu0 0
        %507 = vmatpush1.bf16.msra.mxu0 0
        %508 = vmatprep.subr.bf16.mxu0 0
        %509 = vmatpush1.bf16.msra.mxu0 0
        %510 = vmatprep.subr.bf16.mxu0 0
        %511 = vmatpush1.bf16.msra.mxu0 0
        %512 = vmatprep.mubr.bf16.mxu0 0
        %513 = vmatmul.mubr.bf16.gmra.mrb[0].mxu0 %v478
        %v514 = vpop.f32.mrb[0].mxu0
        %v515 = vadd.f32 %v463, %v514
        %v516 = vpop.f32.mrb[0].mxu0
        %v517 = vpop.f32.mrb[0].mxu0
        %v518 = vpop.f32.mrb[0].mxu0
        %519 = vdwg.mxu0
        %v520 = vpack.c.bf16 %v515, %v515
        %s521 = scalar_lea.vmem %s375, 4 [#allocation10]
        %522 = vst.msk [vmem:[%s521] sm:$0xf] %vm449, %v520
        %v523 = vld [vmem:[%s332] sm:$0xf]
        %s524 = scalar_lea.vmem [#allocation8], 32
        %v525 = vld [vmem:[%s524] sm:$0xf]
        %v526 = vld [vmem:[%s524 + $0x4] sm:$0xf]
        %v527 = vld [vmem:[%s524 + $0x8] sm:$0xf]
        %v528 = vld [vmem:[%s524 + $0xc] sm:$0xf]
        %s529 = scalar_lea.vmem %s378, 2
        %v530 = vld [vmem:[%s529] sm:$0x1]
        %v532 = vlaneseq
        %v533 = vshrl.u32 %v532, 7
        %v534 = vsub.s32 0, %v533
        %v535 = vrot.slane %v530, %v534
        %v541 = vunpack.c.l.b16 %v525
        %v542 = vunpack.c.l.b16 %v526
        %v543 = vunpack.c.l.b16 %v527
        %v544 = vunpack.c.l.b16 %v528
        %v545 = vpack.c.b16 %v542, %v541
        %v546 = vpack.c.b16 %v544, %v543
        %v550 = vsel %vm404, %v523, 0
        %552 = vmatprep.subr.bf16.mxu0 0
        %553 = vmatpush1.bf16.msra.mxu0 %v545
        %554 = vmatprep.subr.bf16.mxu0 0
        %555 = vmatpush1.bf16.msra.mxu0 %v546
        %556 = vmatprep.subr.bf16.mxu0 0
        %557 = vmatpush1.bf16.msra.mxu0 0
        %558 = vmatprep.subr.bf16.mxu0 0
        %559 = vmatpush1.bf16.msra.mxu0 0
        %560 = vmatprep.subr.bf16.mxu0 0
        %561 = vmatpush1.bf16.msra.mxu0 0
        %562 = vmatprep.subr.bf16.mxu0 0
        %563 = vmatpush1.bf16.msra.mxu0 0
        %564 = vmatprep.subr.bf16.mxu0 0
        %565 = vmatpush1.bf16.msra.mxu0 0
        %566 = vmatprep.subr.bf16.mxu0 0
        %567 = vmatpush1.bf16.msra.mxu0 0
        %568 = vmatprep.subr.bf16.mxu0 0
        %569 = vmatpush1.bf16.msra.mxu0 0
        %570 = vmatprep.subr.bf16.mxu0 0
        %571 = vmatpush1.bf16.msra.mxu0 0
        %572 = vmatprep.subr.bf16.mxu0 0
        %573 = vmatpush1.bf16.msra.mxu0 0
        %574 = vmatprep.subr.bf16.mxu0 0
        %575 = vmatpush1.bf16.msra.mxu0 0
        %576 = vmatprep.subr.bf16.mxu0 0
        %577 = vmatpush1.bf16.msra.mxu0 0
        %578 = vmatprep.subr.bf16.mxu0 0
        %579 = vmatpush1.bf16.msra.mxu0 0
        %580 = vmatprep.subr.bf16.mxu0 0
        %581 = vmatpush1.bf16.msra.mxu0 0
        %582 = vmatprep.subr.bf16.mxu0 0
        %583 = vmatpush1.bf16.msra.mxu0 0
        %584 = vmatprep.mubr.bf16.mxu0 0
        %585 = vmatmul.mubr.bf16.gmra.mrb[0].mxu0 %v550
        %v586 = vpop.f32.mrb[0].mxu0
        %v587 = vadd.f32 %v535, %v586
        %v588 = vpop.f32.mrb[0].mxu0
        %v589 = vpop.f32.mrb[0].mxu0
        %v590 = vpop.f32.mrb[0].mxu0
        %591 = vdwg.mxu0
        %v592 = vpack.c.bf16 %v587, %v587
        %s593 = scalar_lea.vmem %s375, 8 [#allocation10]
        %594 = vst.msk [vmem:[%s593] sm:$0xf] %vm449, %v592
        %s595 = sand.u32 %s193, 1
        %s596 = scalar_lea.sflag [#allocation4], %s595
        %s597 = sand.u32 %s193, 1
        %s598 = smul.addr %s597, 12
        %s599 = scalar_lea.vmem [#allocation10], %s598
        // Predicated region
        $region57: #{tpu_custom_call.1} parent=39 // pred_check
          %p600 = pneg %p203
        $region58: #{tpu_custom_call.1} parent=39 // pred_check_branch
          %602 = sbr.rel (%p600) target = $region60
        $region59: #{tpu_custom_call.1} parent=39 // pred_region
          %s604 = ssub.s32 192, 192
          %605 = vsyncadd %s596, %s604
          %s606 = sadd.s32 %s32, %s33
          %s607 = sadd.s32 %s606, %s31
          %s608 = smul.addr %s607, 64
          %s609 = scalar_lea.hbm %s5, %s608
          %s610 = sshll.u32 %s599, 4
          %s611 = int_to_ptr.vmem [resolvable:$true] %s610
          %616 = dma.vmem_to_hbm [thread:$0]  %s611, 192, %s609, %s596, 64, 128, 4
        $region60: #{tpu_custom_call.1} parent=39 // pred_fallthru
          _
      $region40: #{tpu_custom_call.1} parent=5 // pred_fallthru
        _
      %p617 = scmp.le.s32.totalorder 2, %s21
      // Predicated region
      $region61: #{tpu_custom_call.1} parent=5 // pred_check
        %p618 = pneg %p617
      $region62: #{tpu_custom_call.1} parent=5 // pred_check_branch
        %620 = sbr.rel (%p618) target = $region64
      $region63: #{tpu_custom_call.1} parent=5 // pred_region
        %s621 = ssub.s32 %s21, 2
        // Predicated region
        $region65: #{tpu_custom_call.1} parent=63 // pred_check
          %p622 = pneg %p209
        $region66: #{tpu_custom_call.1} parent=63 // pred_check_branch
          %624 = sbr.rel (%p622) target = $region68
        $region67: #{tpu_custom_call.1} parent=63 // pred_region
          %s625 = sand.u32 %s194, 1
          %s626 = scalar_lea.sflag [#allocation4], %s625
          %s627 = sand.u32 %s194, 1
          %s628 = smul.addr %s627, 12
          %s629 = scalar_lea.vmem [#allocation10], %s628
          %630 = dma.done %s626, 192
        $region68: #{tpu_custom_call.1} parent=63 // pred_fallthru
          _
      $region64: #{tpu_custom_call.1} parent=5 // pred_fallthru
        _
    $region6: #{tpu_custom_call.1} parent=1 // loop_footer
      %s25 = sadd.s32 1, %s21
    $region7: #{tpu_custom_call.1} parent=1 // loop_footer_branch
      %20 = sbr.rel target = $region3
    $region8: #{tpu_custom_call.1} parent=1 // loop_exit
      _
    %631 = vsyncpa [#allocation3], 1
    %s632 = scalar_lea.sflag [#allocation3], 1
    %633 = vsyncpa %s632, 1
    %634 = vsyncpa [#allocation6], 1
    %s635 = scalar_lea.sflag [#allocation6], 1
    %636 = vsyncpa %s635, 1
    %637 = vsyncpa [#allocation9], 1
    %638 = vsyncpa [#allocation4], 1
    %s639 = scalar_lea.sflag [#allocation4], 1
    %640 = vsyncpa %s639, 1

</llo_original>
